<compile_context>
chip_gen: v7x
topology: tpu7x:2x2x1
jax: 0.10.0
libtpu: 0.0.40
codegen_flags: <defaults>
</compile_context>

<pallas_src>
import functools

import jax
import jax.numpy as jnp
from jax.experimental import pallas as pl
from jax.experimental.pallas import tpu as pltpu

DEFAULT_MARGIN = 2.0   # ContrastiveLoss.__init__ default
EPS = 1e-6             # torch.nn.PairwiseDistance default eps (added to the difference)

_LANES = 128
_TARGET_TILE_BYTES = 4 * 1024 * 1024  # per input block; fits all generations double-buffered


def _partial_sums_kernel(x_ref, part_ref, *, tile_b, batch, feat, margin, eps):
    """One batch tile -> (sum d^2, sum hinge^2) partials for this tile.

    x_ref    : [tile_b, 2*feat] f32  (pair axis folded into lanes: [o1 | o2])
    part_ref : [1, 128]        f32   lane 0 = sum(d^2), lane 1 = sum(hinge^2)
    """
    i = pl.program_id(0)

    x = x_ref[...]
    o1 = x[:, :feat]
    o2 = x[:, feat:]

    # PairwiseDistance(p=2): || (x1 - x2) + eps ||_2 along the feature axis.
    diff = (o1 - o2) + eps
    d2 = jnp.sum(diff * diff, axis=-1, keepdims=True)          # [tile_b, 1]
    dist = jnp.sqrt(d2)
    hinge = jnp.maximum(margin - dist, 0.0)
    h2 = hinge * hinge                                          # [tile_b, 1]

    # Mask padded rows of a partial final tile (scalar accumulation, no [B,1] carry).
    row = jax.lax.broadcasted_iota(jnp.int32, (tile_b, 1), 0) + i * tile_b
    valid = row < batch
    s_d2 = jnp.sum(jnp.where(valid, d2, 0.0))
    s_h2 = jnp.sum(jnp.where(valid, h2, 0.0))

    # Lane-dense, unmasked [1, 128] store of the two partial sums.
    lane = jax.lax.broadcasted_iota(jnp.int32, (1, _LANES), 1)
    part_ref[...] = jnp.where(lane == 0, s_d2,
                              jnp.where(lane == 1, s_h2, 0.0))


def _pick_tile_b(batch, two_feat):
    """Largest batch tile (multiple of 8) whose f32 block stays ~4 MiB."""
    row_bytes = two_feat * 4
    tb = max(8, _TARGET_TILE_BYTES // row_bytes)
    tb = min(tb, 2048)
    tb = (tb // 8) * 8
    if batch <= tb:
        return batch  # single block; block == full array dim is always legal
    return tb


def contrastive_loss(outputs, labels, margin=DEFAULT_MARGIN):
    """outputs: [B, 2, D] float, labels: [B, 2, L] float -> scalar f32 loss."""
    outputs = outputs.astype(jnp.float32)
    labels = labels.astype(jnp.float32)
    b, pair, d = outputs.shape
    assert pair == 2, "expected pair axis of size 2"

    # Global scalar `label` term (matches the PyTorch module exactly): tiny fused
    # XLA reduction; keeping it out of the kernel removes two DMA streams.
    label = jnp.sum(labels[:, 0, :] * labels[:, 1, :])

    # Free bitcast: fold the pair axis into lanes -> [B, 2*D]; replaces the
    # strided o1/o2 slices that doubled HBM traffic in the previous version.
    x2d = outputs.reshape(b, 2 * d)

    tile_b = _pick_tile_b(b, 2 * d)
    num_tiles = pl.cdiv(b, tile_b)

    kernel = functools.partial(
        _partial_sums_kernel,
        tile_b=tile_b, batch=b, feat=d, margin=float(margin), eps=EPS,
    )

    parts = pl.pallas_call(
        kernel,
        out_shape=jax.ShapeDtypeStruct((num_tiles, 1, _LANES), jnp.float32),
        grid=(num_tiles,),
        in_specs=[pl.BlockSpec((tile_b, 2 * d), lambda i: (i, 0))],
        out_specs=pl.BlockSpec((None, 1, _LANES), lambda i: (i, 0, 0)),
        compiler_params=pltpu.CompilerParams(
            dimension_semantics=("parallel",),
            vmem_limit_bytes=32 * 1024 * 1024,
        ),
    )(x2d)

    sum_d2 = jnp.sum(parts[:, 0, 0])
    sum_h2 = jnp.sum(parts[:, 0, 1])
    # label is a global scalar, so
    # mean((1-l)*d2 + l*h2) == ((1-l)*sum(d2) + l*sum(h2)) / B.
    return ((1.0 - label) * sum_d2 + label * sum_h2) / b


def _reference_loss(outputs, labels, margin=DEFAULT_MARGIN):
    # Pure-JAX reference mirroring the PyTorch forward, for a sanity check.
    o1, o2 = outputs[:, 0, :], outputs[:, 1, :]
    label = jnp.sum(labels[:, 0, :] * labels[:, 1, :])
    dist = jnp.sqrt(jnp.sum((o1 - o2 + EPS) ** 2, axis=-1))
    return jnp.mean((1.0 - label) * dist**2
                    + label * jnp.maximum(margin - dist, 0.0) ** 2)


if __name__ == "__main__":
    B, D, L = 2, 32, 8
    key = jax.random.PRNGKey(0)
    k_out, k_lab = jax.random.split(key)

    outputs = jax.random.normal(k_out, (B, 2, D), dtype=jnp.float32)
    # labels ~ one-hot-ish floats; product-sum gives the (scalar) "label" term
    labels = (jax.random.uniform(k_lab, (B, 2, L), dtype=jnp.float32) > 0.7).astype(
        jnp.float32
    )

    loss = contrastive_loss(outputs, labels)
    jax.block_until_ready(loss)

    ref = _reference_loss(outputs, labels)
    assert jnp.allclose(loss, ref, rtol=1e-5, atol=1e-5), (loss, ref)

    print("KERNEL_OK")
</pallas_src>

<mosaic_0001>
module attributes {stable_mosaic.version = 11 : i64} {
  func.func @_partial_sums_kernel(%arg0: i32, %arg1: memref<2x64xf32, #tpu.memory_space<vmem>>, %arg2: memref<1x1x128xf32, #tpu.memory_space<vmem>>) attributes {dimension_semantics = [#tpu.dimension_semantics<parallel>], iteration_bounds = array<i64: 1>, scalar_prefetch = 0 : i64, scratch_operands = 0 : i64, tpu.core_type = #tpu.core_type<tc>, window_params = [{transform_indices = @transform_0, window_bounds = array<i64: 2, 64>}, {transform_indices = @transform_1, window_bounds = array<i64: 1, 1, 128>}]} {
    %c0 = arith.constant 0 : index
    %c0_0 = arith.constant 0 : index
    %0 = vector.load %arg1[%c0, %c0_0] : memref<2x64xf32, #tpu.memory_space<vmem>>, vector<2x64xf32>
    %1 = vector.extract_strided_slice %0 {offsets = [0, 0], sizes = [2, 32], strides = [1, 1]} : vector<2x64xf32> to vector<2x32xf32>
    %2 = vector.extract_strided_slice %0 {offsets = [0, 32], sizes = [2, 32], strides = [1, 1]} : vector<2x64xf32> to vector<2x32xf32>
    %3 = arith.subf %1, %2 : vector<2x32xf32>
    %cst = arith.constant 9.99999997E-7 : f32
    %4 = vector.broadcast %cst : f32 to vector<2x32xf32>
    %5 = arith.addf %3, %4 : vector<2x32xf32>
    %6 = arith.mulf %5, %5 : vector<2x32xf32>
    %cst_1 = arith.constant dense<0.000000e+00> : vector<2xf32>
    %7 = vector.multi_reduction <add>, %6, %cst_1 [1] : vector<2x32xf32> to vector<2xf32>
    %8 = vector.shape_cast %7 : vector<2xf32> to vector<2x1xf32>
    %9 = math.sqrt %8 : vector<2x1xf32>
    %cst_2 = arith.constant 2.000000e+00 : f32
    %10 = vector.broadcast %cst_2 : f32 to vector<2x1xf32>
    %11 = arith.subf %10, %9 : vector<2x1xf32>
    %cst_3 = arith.constant 0.000000e+00 : f32
    %12 = vector.broadcast %cst_3 : f32 to vector<2x1xf32>
    %13 = arith.maximumf %11, %12 : vector<2x1xf32>
    %14 = arith.mulf %13, %13 : vector<2x1xf32>
    %15 = tpu.iota {dimensions = array<i32: 0>} : vector<2x1xi32>
    %c2_i32 = arith.constant 2 : i32
    %16 = arith.muli %arg0, %c2_i32 : i32
    %17 = vector.broadcast %16 : i32 to vector<2x1xi32>
    %18 = arith.addi %15, %17 : vector<2x1xi32>
    %c2_i32_4 = arith.constant 2 : i32
    %19 = vector.broadcast %c2_i32_4 : i32 to vector<2x1xi32>
    %20 = arith.cmpi slt, %18, %19 : vector<2x1xi32>
    %cst_5 = arith.constant 0.000000e+00 : f32
    %21 = vector.broadcast %cst_5 : f32 to vector<2x1xf32>
    %22 = arith.select %20, %8, %21 : vector<2x1xi1>, vector<2x1xf32>
    %23 = vector.shape_cast %22 : vector<2x1xf32> to vector<1x2x1xf32>
    %cst_6 = arith.constant dense<0.000000e+00> : vector<1xf32>
    %24 = vector.multi_reduction <add>, %23, %cst_6 [1, 2] : vector<1x2x1xf32> to vector<1xf32>
    %25 = vector.shape_cast %24 : vector<1xf32> to vector<1x1x1xf32>
    %26 = vector.extract %25[0, 0, 0] : f32 from vector<1x1x1xf32>
    %cst_7 = arith.constant 0.000000e+00 : f32
    %27 = vector.broadcast %cst_7 : f32 to vector<2x1xf32>
    %28 = arith.select %20, %14, %27 : vector<2x1xi1>, vector<2x1xf32>
    %29 = vector.shape_cast %28 : vector<2x1xf32> to vector<1x2x1xf32>
    %cst_8 = arith.constant dense<0.000000e+00> : vector<1xf32>
    %30 = vector.multi_reduction <add>, %29, %cst_8 [1, 2] : vector<1x2x1xf32> to vector<1xf32>
    %31 = vector.shape_cast %30 : vector<1xf32> to vector<1x1x1xf32>
    %32 = vector.extract %31[0, 0, 0] : f32 from vector<1x1x1xf32>
    %33 = tpu.iota {dimensions = array<i32: 1>} : vector<1x128xi32>
    %c0_i32 = arith.constant 0 : i32
    %34 = vector.broadcast %c0_i32 : i32 to vector<1x128xi32>
    %35 = arith.cmpi eq, %33, %34 : vector<1x128xi32>
    %c1_i32 = arith.constant 1 : i32
    %36 = vector.broadcast %c1_i32 : i32 to vector<1x128xi32>
    %37 = arith.cmpi eq, %33, %36 : vector<1x128xi32>
    %cst_9 = arith.constant 0.000000e+00 : f32
    %38 = vector.broadcast %32 : f32 to vector<1x128xf32>
    %39 = vector.broadcast %cst_9 : f32 to vector<1x128xf32>
    %40 = arith.select %37, %38, %39 : vector<1x128xi1>, vector<1x128xf32>
    %41 = vector.broadcast %26 : f32 to vector<1x128xf32>
    %42 = arith.select %35, %41, %40 : vector<1x128xi1>, vector<1x128xf32>
    %c0_10 = arith.constant 0 : index
    %c0_11 = arith.constant 0 : index
    %c0_12 = arith.constant 0 : index
    %43 = vector.load %arg2[%c0_10, %c0_11, %c0_12] : memref<1x1x128xf32, #tpu.memory_space<vmem>>, vector<1x1x128xf32>
    %44 = vector.shape_cast %43 : vector<1x1x128xf32> to vector<1x128xf32>
    %45 = vector.shape_cast %42 : vector<1x128xf32> to vector<1x1x128xf32>
    tpu.vector_store %arg2[%c0_10, %c0_11, %c0_12], %45 {strides = array<i32>} : memref<1x1x128xf32, #tpu.memory_space<vmem>>, vector<1x1x128xf32>,
    return
  }
  func.func @transform_0(%arg0: i32) -> (i32, i32) {
    %c0_i32 = arith.constant 0 : i32
    %c0_i32_0 = arith.constant 0 : i32
    return %arg0, %c0_i32 : i32, i32
  }
  func.func @transform_1(%arg0: i32) -> (i32, i32, i32) {
    %c0_i32 = arith.constant 0 : i32
    %c0_i32_0 = arith.constant 0 : i32
    %c0_i32_1 = arith.constant 0 : i32
    return %arg0, %c0_i32, %c0_i32_0 : i32, i32, i32
  }
}

</mosaic_0001>

<llo_original>
// kernel: tpu_custom_call.1
$region0: #{tpu_custom_call.1}
  #allocation0 [shape = 'u32[]', space=smem, size = 0x4, offset = 0x4, fixed_abs, tag = 'smem constant byte address 0x4 - core index']
  #allocation1 [shape = 'u32[144,128]{1,0:T(1,128)}', space=vmem, size = 0x12000, scoped, tag = 'internal scratch']
  %s0 = inlined_call_operand.hbm [shape: f32[2,64], index: 0, kind: input, shape index: {}]
  %s1 = inlined_call_operand.hbm [shape: f32[1,1,128], index: 1, kind: output, shape index: {}]
  %s2 = sld [smem:[#allocation0]]
  $region18: #{tpu_custom_call.1} parent=0
    _
  %s4 = ssub.s32 1, %s2
  %s5 = scalar_select 0, %s4, %s2
  $region1: #{tpu_custom_call.1} parent=0
    #allocation2 [shape = 'u8[1024]{0}', space=vmem, size = 0x400, scoped, tag = 'input window, operand 0, single buffered']
    #allocation3 [shape = 's32[1]{0}', space=sflag, size = 0x4, scoped, tag = 'scoped memory for tpu_custom_call.1']
    #allocation4 [shape = 's32[1]{0}', space=sflag, size = 0x4, scoped, tag = 'scoped memory for tpu_custom_call.1']
    #allocation5 [shape = 'u8[512]{0}', space=vmem, size = 0x400, scoped, tag = 'output window, operand 0, single buffered']
    %6 = vsyncpa [#allocation3], 0
    %7 = vsyncpa [#allocation4], 0
    // Predicated region
    $region2: #{tpu_custom_call.1} parent=1 // pred_check
      _
    $region3: #{tpu_custom_call.1} parent=1 // pred_check_branch
      %9 = sbr.rel (0) target = $region5
    $region4: #{tpu_custom_call.1} parent=1 // pred_region
      %s11 = ssub.s32 32, 32
      %12 = vsyncadd [#allocation3], %s11
      %s14 = sshll.u32 [#allocation2], 4
      %s15 = int_to_ptr.vmem [resolvable:$true] %s14
      %17 = dma.hbm_to_vmem [thread:$0]  %s0, 32, %s15, [#allocation3]
    $region5: #{tpu_custom_call.1} parent=1 // pred_fallthru
      _
    // Predicated region
    $region6: #{tpu_custom_call.1} parent=1 // pred_check
      _
    $region7: #{tpu_custom_call.1} parent=1 // pred_check_branch
      %19 = sbr.rel (0) target = $region9
    $region8: #{tpu_custom_call.1} parent=1 // pred_region
      %20 = dma.done [#allocation3], 32
    $region9: #{tpu_custom_call.1} parent=1 // pred_fallthru
      _
    %v21 = vld [vmem:[#allocation2] sm:$0x3]
    %23 = vrot.lane.b32.xlu0 %v21, 96
    %v24 = vpop.permute.xlu0 %23
    %v26 = vsub.f32 %v21, %v24
    %v27 = vadd.f32 %v26, 1e-06
    %v28 = vmul.f32 %v27, %v27
    %vm29 = vcmask 254976
    %v30 = vsel %vm29, %v28, 0.0
    %31 = vadd.xlane.f32.xlu0 %v30
    %v32 = vpop.xlane.xlu0 %31
    %v33 = vrsqrt.pop %v32
    %v34 = vmul.f32 %v32, %v33
    %vm35 = vcmp.eq.f32.partialorder %v32, inf
    %v36 = vsel %vm35, %v32, %v34
    %vm37 = vcmp.eq.f32.partialorder %v32, 0.0
    %v38 = vand.u32 %v32, 2147483648
    %v39 = vsel %vm37, %v38, %v36
    %v40 = vsub.f32 2.0, %v39
    %v41 = vmax.f32 %v40, 0.0
    %v42 = vmul.f32 %v41, %v41
    %v43 = vlaneseq
    %v44 = vshrl.u32 %v43, 7
    %s45 = smul.u32 0, 2
    %v46 = vstv %s45
    %v47 = vadd.s32 %v44, %v46
    %vm48 = vcmp.lt.s32.totalorder %v47, 2
    %v49 = vsel %vm48, %v32, 0.0
    %vm50 = vcmask 1024
    %v51 = vsel %vm50, %v49, 0.0
    %52 = vadd.xlane.f32.xlu0 %v51
    %v53 = vpop.xlane.xlu0 %52
    %v54 = vrot.slane %v53, 4
    %v55 = vadd.f32 %v53, %v54
    %v56 = vrot.slane %v55, 2
    %v57 = vadd.f32 %v55, %v56
    %v58 = vrot.slane %v57, 1
    %v59 = vadd.f32 %v57, %v58
    %s60 = vtos %v59
    %v61 = vsel %vm48, %v42, 0.0
    %v62 = vsel %vm50, %v61, 0.0
    %63 = vadd.xlane.f32.xlu0 %v62
    %v64 = vpop.xlane.xlu0 %63
    %v65 = vrot.slane %v64, 4
    %v66 = vadd.f32 %v64, %v65
    %v67 = vrot.slane %v66, 2
    %v68 = vadd.f32 %v66, %v67
    %v69 = vrot.slane %v68, 1
    %v70 = vadd.f32 %v68, %v69
    %s71 = vtos %v70
    %v72 = vlaneseq
    %v73 = vand.u32 %v72, 127
    %vm74 = vcmp.eq.s32.totalorder %v73, 0
    %vm75 = vcmp.eq.s32.totalorder %v73, 1
    %v76 = vstv %s71
    %v77 = vsel %vm75, %v76, 0.0
    %v78 = vstv %s60
    %v79 = vsel %vm74, %v78, %v77
    %80 = vst [vmem:[#allocation5] sm:$0x1] %v79
    // Predicated region
    $region10: #{tpu_custom_call.1} parent=1 // pred_check
      _
    $region11: #{tpu_custom_call.1} parent=1 // pred_check_branch
      %82 = sbr.rel (0) target = $region13
    $region12: #{tpu_custom_call.1} parent=1 // pred_region
      %s84 = ssub.s32 16, 16
      %85 = vsyncadd [#allocation4], %s84
      %s87 = sshll.u32 [#allocation5], 4
      %s88 = int_to_ptr.vmem [resolvable:$true] %s87
      %90 = dma.vmem_to_hbm [thread:$0]  %s88, 16, %s1, [#allocation4]
    $region13: #{tpu_custom_call.1} parent=1 // pred_fallthru
      _
    // Predicated region
    $region14: #{tpu_custom_call.1} parent=1 // pred_check
      _
    $region15: #{tpu_custom_call.1} parent=1 // pred_check_branch
      %92 = sbr.rel (0) target = $region17
    $region16: #{tpu_custom_call.1} parent=1 // pred_region
      %93 = dma.done [#allocation4], 16
    $region17: #{tpu_custom_call.1} parent=1 // pred_fallthru
      _
    %94 = vsyncpa [#allocation3], 1
    %95 = vsyncpa [#allocation4], 1

</llo_original>
